<compile_context>
chip_gen: v6e
topology: v6e:2x2x1
jax: 0.10.0
libtpu: 0.0.40
codegen_flags: <defaults>
</compile_context>

<pallas_src>
import functools

import jax
import jax.numpy as jnp
from jax import lax
from jax.experimental import pallas as pl
from jax.experimental.pallas import tpu as pltpu

_LANE = 128
# Explicit scoped-VMEM limit: safe on every generation (v5e/v6e: 128 MiB
# physical VMEM; v7x: 64 MiB per TensorCore, 48 MiB scoped leaves headroom).
_VMEM_LIMIT_BYTES = 48 * 1024 * 1024
# Budget for 2 inputs x 2 pipeline buffers per block, at the *input* dtype.
_PIPELINE_BUDGET_BYTES = 32 * 1024 * 1024
# Budget for live f32 temporaries inside the kernel (~4 chunk-sized arrays:
# the two upcast chunks plus p*t and p+t).
_TEMP_BUDGET_BYTES = 8 * 1024 * 1024


def _round_up(x, m):
    return (x + m - 1) // m * m


def _choose_tiling(nc, hw, itemsize):
    """Pick (tile_rows, col_block, chunk) under the VMEM budgets above."""
    # Sublane multiple for the input dtype (f32: 8, bf16: 16, int8/fp8: 32).
    sub = {4: 8, 2: 16, 1: 32}.get(itemsize, 8)
    hw_pad = _round_up(hw, _LANE)

    max_block_elems = max(_PIPELINE_BUDGET_BYTES // (4 * itemsize), sub * _LANE)

    # Rows first (keeps the reduction grid short); spill into column tiling
    # only for very large images.
    tile_rows = (max_block_elems // hw_pad) // sub * sub
    tile_rows = max(sub, min(tile_rows, 4096))
    tile_rows = min(tile_rows, _round_up(nc, sub))
    if nc >= 2 * sub:
        # v7x megacore: keep at least 2 tiles on the "parallel" row axis.
        tile_rows = min(tile_rows, _round_up(pl.cdiv(nc, 2), sub))

    col_block = max_block_elems // tile_rows
    col_block = min(col_block, hw_pad)
    col_block = max(_LANE, (col_block // _LANE) * _LANE)

    # Lane-chunk width so that ~4 live f32 chunk temporaries stay in budget.
    chunk = (_TEMP_BUDGET_BYTES // (4 * 4 * tile_rows)) // _LANE * _LANE
    chunk = max(_LANE, min(chunk, 4096, col_block))
    # col_block must be a multiple of the chunk width.
    col_block = max(chunk, (col_block // chunk) * chunk)
    return int(tile_rows), int(col_block), int(chunk)


def _dice_kernel(p_ref, t_ref, loss_ref, inter_acc, sum_acc, *,
                 hw, col_block, chunk, mask_cols):
    j = pl.program_id(1)                 # column / reduction axis (innermost)
    nj = pl.num_programs(1)

    @pl.when(j == 0)
    def _init():
        inter_acc[...] = jnp.zeros_like(inter_acc)
        sum_acc[...] = jnp.zeros_like(sum_acc)

    num_chunks = col_block // chunk
    groups = chunk // _LANE

    def process_chunk(c, masked):
        if isinstance(c, int):
            start = c * chunk
        else:
            start = pl.multiple_of(c * chunk, chunk)
        p = p_ref[:, pl.ds(start, chunk)].astype(jnp.float32)
        t = t_ref[:, pl.ds(start, chunk)].astype(jnp.float32)
        if masked:
            col_ids = (j * col_block + start
                       + lax.broadcasted_iota(jnp.int32, (1, chunk), 1))
            ok = col_ids < hw
            p = jnp.where(ok, p, 0.0)
            t = jnp.where(ok, t, 0.0)
        pt = p * t
        ps = p + t
        # Lane-dense accumulation: fold the chunk onto 128 lanes with pure
        # VPU adds; no per-step cross-lane (XLU) reduction.
        ig = pt[:, 0:_LANE]
        sg = ps[:, 0:_LANE]
        for g in range(1, groups):
            ig = ig + pt[:, g * _LANE:(g + 1) * _LANE]
            sg = sg + ps[:, g * _LANE:(g + 1) * _LANE]
        inter_acc[...] += ig
        sum_acc[...] += sg

    def accumulate(masked):
        if num_chunks <= 8:
            for c in range(num_chunks):
                process_chunk(c, masked)
        else:
            @pl.loop(0, num_chunks)
            def _chunks(c):
                process_chunk(c, masked)

    if mask_cols:
        # Interior reduction steps take the unmasked fast path; only the last
        # column tile pays for iota/compare/select.
        @pl.when(j < nj - 1)
        def _interior():
            accumulate(masked=False)

        @pl.when(j == nj - 1)
        def _edge():
            accumulate(masked=True)
    else:
        accumulate(masked=False)

    @pl.when(j == nj - 1)
    def _finalize():
        intersect = jnp.sum(inter_acc[...], axis=1, keepdims=True)
        total = jnp.sum(sum_acc[...], axis=1, keepdims=True)
        loss_ref[...] = 1.0 - (2.0 * intersect + 1.0) / (total + 1.0)


def dice_loss(predict, target, *, _force_tiling=None):
    assert predict.shape == target.shape and predict.ndim == 4
    N, C, H, W = predict.shape
    nc, hw = N * C, H * W

    p2 = predict.reshape(nc, hw)
    t2 = target.reshape(nc, hw)

    itemsize = max(jnp.dtype(predict.dtype).itemsize,
                   jnp.dtype(target.dtype).itemsize)
    if _force_tiling is None:
        tile_rows, col_block, chunk = _choose_tiling(nc, hw, itemsize)
    else:
        tile_rows, col_block, chunk = _force_tiling

    num_row_tiles = pl.cdiv(nc, tile_rows)
    num_col_tiles = pl.cdiv(hw, col_block)
    rows_total = num_row_tiles * tile_rows
    mask_cols = num_col_tiles * col_block > hw

    kernel = functools.partial(
        _dice_kernel, hw=hw, col_block=col_block, chunk=chunk,
        mask_cols=mask_cols)

    bytes_in = nc * hw * (jnp.dtype(predict.dtype).itemsize
                          + jnp.dtype(target.dtype).itemsize)
    cost = pl.CostEstimate(flops=5 * nc * hw, transcendentals=0,
                           bytes_accessed=bytes_in + rows_total * 4)

    per_row_loss = pl.pallas_call(
        kernel,
        out_shape=jax.ShapeDtypeStruct((rows_total, 1), jnp.float32),
        grid_spec=pltpu.PrefetchScalarGridSpec(
            num_scalar_prefetch=0,
            grid=(num_row_tiles, num_col_tiles),
            in_specs=[
                pl.BlockSpec((tile_rows, col_block), lambda i, j: (i, j)),
                pl.BlockSpec((tile_rows, col_block), lambda i, j: (i, j)),
            ],
            # Per-row losses, written once per row tile at the last reduction
            # step -> row axis carries no cross-step state and stays
            # "parallel" (both v7x TensorCores).
            out_specs=pl.BlockSpec((tile_rows, 1), lambda i, j: (i, 0)),
            scratch_shapes=[
                pltpu.VMEM((tile_rows, _LANE), jnp.float32),   # intersect
                pltpu.VMEM((tile_rows, _LANE), jnp.float32),   # sum_p + sum_t
            ],
        ),
        compiler_params=pltpu.CompilerParams(
            dimension_semantics=("parallel", "arbitrary"),
            vmem_limit_bytes=_VMEM_LIMIT_BYTES),
        cost_estimate=cost,
    )(p2, t2)

    # Rows >= nc are padding and may hold garbage: slice BEFORE the tiny mean.
    return jnp.sum(per_row_loss[:nc, 0]) / jnp.float32(nc)


def dice_loss_ref(predict, target):
    predict = predict.astype(jnp.float32)
    target = target.astype(jnp.float32)
    intersect = (predict * target).sum(axis=2).sum(axis=2)
    loss = 1.0 - (2.0 * intersect + 1.0) / (
        predict.sum(axis=2).sum(axis=2) + target.sum(axis=2).sum(axis=2) + 1.0
    )
    return loss.mean()


if __name__ == "__main__":
    key = jax.random.PRNGKey(0)

    def make_inputs(k, shape):
        k1, k2 = jax.random.split(k)
        predict = jax.nn.sigmoid(jax.random.normal(k1, shape, jnp.float32))
        target = (jax.random.uniform(k2, shape) > 0.5).astype(jnp.float32)
        return predict, target

    # (shape, forced (tile_rows, col_block, chunk) or None for auto tiling)
    cases = [
        ((2, 4, 16, 16), None),            # aligned, single block
        ((2, 4, 12, 12), None),            # hw not lane-multiple -> masked edge tile
        ((3, 4, 16, 16), (8, 128, 128)),   # multi row/col tiles, cross-step accumulation
        ((2, 4, 18, 18), (8, 256, 128)),   # interior fast path + masked last column tile
        ((2, 4, 34, 34), (8, 1280, 128)),  # >8 chunks -> pl.loop chunked accumulation
    ]
    for idx, (shape, forced) in enumerate(cases):
        key, subkey = jax.random.split(key)
        predict, target = make_inputs(subkey, shape)
        out = jax.block_until_ready(
            dice_loss(predict, target, _force_tiling=forced))
        ref = dice_loss_ref(predict, target)
        assert jnp.allclose(out, ref, atol=1e-5, rtol=1e-5), (idx, shape, out, ref)
    print("KERNEL_OK")
</pallas_src>

<mosaic_0001>
module attributes {stable_mosaic.version = 11 : i64} {
  func.func @_dice_kernel(%arg0: i32, %arg1: i32, %arg2: memref<8x256xf32, #tpu.memory_space<vmem>>, %arg3: memref<8x256xf32, #tpu.memory_space<vmem>>, %arg4: memref<8x1xf32, #tpu.memory_space<vmem>>, %arg5: memref<8x128xf32, #tpu.memory_space<vmem>>, %arg6: memref<8x128xf32, #tpu.memory_space<vmem>>) attributes {dimension_semantics = [#tpu.dimension_semantics<parallel>, #tpu.dimension_semantics<arbitrary>], iteration_bounds = array<i64: 1, 1>, scalar_prefetch = 0 : i64, scratch_operands = 2 : i64, tpu.core_type = #tpu.core_type<tc>, window_params = [{transform_indices = @transform_0, window_bounds = array<i64: 8, 256>}, {transform_indices = @transform_1, window_bounds = array<i64: 8, 256>}, {transform_indices = @transform_2, window_bounds = array<i64: 8, 1>}]} {
    %c0_i32 = arith.constant 0 : i32
    %0 = arith.cmpi eq, %arg1, %c0_i32 : i32
    %1 = arith.extui %0 : i1 to i32
    %c0_i32_0 = arith.constant 0 : i32
    %2 = arith.cmpi ne, %1, %c0_i32_0 : i32
    scf.if %2 {
      %cst = arith.constant 0.000000e+00 : f32
      %22 = vector.broadcast %cst : f32 to vector<8x128xf32>
      %c0_14 = arith.constant 0 : index
      %c0_15 = arith.constant 0 : index
      %23 = vector.load %arg5[%c0_14, %c0_15] : memref<8x128xf32, #tpu.memory_space<vmem>>, vector<8x128xf32>
      tpu.vector_store %arg5[%c0_14, %c0_15], %22 {strides = array<i32>} : memref<8x128xf32, #tpu.memory_space<vmem>>, vector<8x128xf32>,
      %cst_16 = arith.constant 0.000000e+00 : f32
      %24 = vector.broadcast %cst_16 : f32 to vector<8x128xf32>
      %c0_17 = arith.constant 0 : index
      %c0_18 = arith.constant 0 : index
      %25 = vector.load %arg6[%c0_17, %c0_18] : memref<8x128xf32, #tpu.memory_space<vmem>>, vector<8x128xf32>
      tpu.vector_store %arg6[%c0_17, %c0_18], %24 {strides = array<i32>} : memref<8x128xf32, #tpu.memory_space<vmem>>, vector<8x128xf32>,
    } else {
    }
    %c0 = arith.constant 0 : index
    %c0_1 = arith.constant 0 : index
    %3 = vector.load %arg2[%c0, %c0_1] : memref<8x256xf32, #tpu.memory_space<vmem>>, vector<8x256xf32>
    %c0_2 = arith.constant 0 : index
    %c0_3 = arith.constant 0 : index
    %4 = vector.load %arg3[%c0_2, %c0_3] : memref<8x256xf32, #tpu.memory_space<vmem>>, vector<8x256xf32>
    %5 = arith.mulf %3, %4 : vector<8x256xf32>
    %6 = arith.addf %3, %4 : vector<8x256xf32>
    %7 = vector.extract_strided_slice %5 {offsets = [0, 0], sizes = [8, 128], strides = [1, 1]} : vector<8x256xf32> to vector<8x128xf32>
    %8 = vector.extract_strided_slice %6 {offsets = [0, 0], sizes = [8, 128], strides = [1, 1]} : vector<8x256xf32> to vector<8x128xf32>
    %9 = vector.extract_strided_slice %5 {offsets = [0, 128], sizes = [8, 128], strides = [1, 1]} : vector<8x256xf32> to vector<8x128xf32>
    %10 = arith.addf %7, %9 : vector<8x128xf32>
    %11 = vector.extract_strided_slice %6 {offsets = [0, 128], sizes = [8, 128], strides = [1, 1]} : vector<8x256xf32> to vector<8x128xf32>
    %12 = arith.addf %8, %11 : vector<8x128xf32>
    %c0_4 = arith.constant 0 : index
    %c0_5 = arith.constant 0 : index
    %13 = vector.load %arg5[%c0_4, %c0_5] : memref<8x128xf32, #tpu.memory_space<vmem>>, vector<8x128xf32>
    %14 = arith.addf %13, %10 : vector<8x128xf32>
    %c0_6 = arith.constant 0 : index
    %c0_7 = arith.constant 0 : index
    %15 = vector.load %arg5[%c0_6, %c0_7] : memref<8x128xf32, #tpu.memory_space<vmem>>, vector<8x128xf32>
    tpu.vector_store %arg5[%c0_6, %c0_7], %14 {strides = array<i32>} : memref<8x128xf32, #tpu.memory_space<vmem>>, vector<8x128xf32>,
    %c0_8 = arith.constant 0 : index
    %c0_9 = arith.constant 0 : index
    %16 = vector.load %arg6[%c0_8, %c0_9] : memref<8x128xf32, #tpu.memory_space<vmem>>, vector<8x128xf32>
    %17 = arith.addf %16, %12 : vector<8x128xf32>
    %c0_10 = arith.constant 0 : index
    %c0_11 = arith.constant 0 : index
    %18 = vector.load %arg6[%c0_10, %c0_11] : memref<8x128xf32, #tpu.memory_space<vmem>>, vector<8x128xf32>
    tpu.vector_store %arg6[%c0_10, %c0_11], %17 {strides = array<i32>} : memref<8x128xf32, #tpu.memory_space<vmem>>, vector<8x128xf32>,
    %c0_i32_12 = arith.constant 0 : i32
    %19 = arith.cmpi eq, %arg1, %c0_i32_12 : i32
    %20 = arith.extui %19 : i1 to i32
    %c0_i32_13 = arith.constant 0 : i32
    %21 = arith.cmpi ne, %20, %c0_i32_13 : i32
    scf.if %21 {
      %c0_14 = arith.constant 0 : index
      %c0_15 = arith.constant 0 : index
      %22 = vector.load %arg5[%c0_14, %c0_15] : memref<8x128xf32, #tpu.memory_space<vmem>>, vector<8x128xf32>
      %cst = arith.constant dense<0.000000e+00> : vector<8xf32>
      %23 = vector.multi_reduction <add>, %22, %cst [1] : vector<8x128xf32> to vector<8xf32>
      %24 = vector.shape_cast %23 : vector<8xf32> to vector<8x1xf32>
      %c0_16 = arith.constant 0 : index
      %c0_17 = arith.constant 0 : index
      %25 = vector.load %arg6[%c0_16, %c0_17] : memref<8x128xf32, #tpu.memory_space<vmem>>, vector<8x128xf32>
      %cst_18 = arith.constant dense<0.000000e+00> : vector<8xf32>
      %26 = vector.multi_reduction <add>, %25, %cst_18 [1] : vector<8x128xf32> to vector<8xf32>
      %27 = vector.shape_cast %26 : vector<8xf32> to vector<8x1xf32>
      %cst_19 = arith.constant 2.000000e+00 : f32
      %28 = vector.broadcast %cst_19 : f32 to vector<8x1xf32>
      %29 = arith.mulf %28, %24 : vector<8x1xf32>
      %cst_20 = arith.constant 1.000000e+00 : f32
      %30 = vector.broadcast %cst_20 : f32 to vector<8x1xf32>
      %31 = arith.addf %29, %30 : vector<8x1xf32>
      %cst_21 = arith.constant 1.000000e+00 : f32
      %32 = vector.broadcast %cst_21 : f32 to vector<8x1xf32>
      %33 = arith.addf %27, %32 : vector<8x1xf32>
      %34 = arith.divf %31, %33 : vector<8x1xf32>
      %cst_22 = arith.constant 1.000000e+00 : f32
      %35 = vector.broadcast %cst_22 : f32 to vector<8x1xf32>
      %36 = arith.subf %35, %34 : vector<8x1xf32>
      %c0_23 = arith.constant 0 : index
      %c0_24 = arith.constant 0 : index
      %37 = vector.load %arg4[%c0_23, %c0_24] : memref<8x1xf32, #tpu.memory_space<vmem>>, vector<8x1xf32>
      tpu.vector_store %arg4[%c0_23, %c0_24], %36 {strides = array<i32>} : memref<8x1xf32, #tpu.memory_space<vmem>>, vector<8x1xf32>,
    } else {
    }
    return
  }
  func.func @transform_0(%arg0: i32, %arg1: i32) -> (i32, i32) {
    %c0_i32 = arith.constant 0 : i32
    return %arg0, %arg1 : i32, i32
  }
  func.func @transform_1(%arg0: i32, %arg1: i32) -> (i32, i32) {
    %c0_i32 = arith.constant 0 : i32
    return %arg0, %arg1 : i32, i32
  }
  func.func @transform_2(%arg0: i32, %arg1: i32) -> (i32, i32) {
    %c0_i32 = arith.constant 0 : i32
    %c0_i32_0 = arith.constant 0 : i32
    return %arg0, %c0_i32 : i32, i32
  }
}

</mosaic_0001>

<llo_original>
// kernel: tpu_custom_call.1
$region0: #{tpu_custom_call.1}
  #allocation0 [shape = 'u32[]', space=smem, size = 0x4, offset = 0x4, fixed_abs, tag = 'smem constant byte address 0x4 - core index']
  #allocation1 [shape = 'u32[144,128]{1,0:T(1,128)}', space=vmem, size = 0x12000, scoped, tag = 'internal scratch']
  #allocation2 [shape = 'f32[8,128]{1,0:T(8,128)}', space=vmem, size = 0x1000, scoped, tag = 'scratch operand']
  #allocation3 [shape = 'f32[8,128]{1,0:T(8,128)}', space=vmem, size = 0x1000, scoped, tag = 'scratch operand']
  %s0 = inlined_call_operand.hbm [shape: f32[8,256], index: 0, kind: input, shape index: {}]
  %s1 = inlined_call_operand.hbm [shape: f32[8,256], index: 1, kind: input, shape index: {}]
  %s2 = inlined_call_operand.vmem [shape: f32[8,1], index: 2, kind: output, shape index: {}]
  %s3 = sld [smem:[#allocation0]]
  $region34: #{tpu_custom_call.1} parent=0
    _
  %s5 = ssub.s32 1, %s3
  %s6 = scalar_select 0, %s5, %s3
  $region1: #{tpu_custom_call.1} parent=0
    #allocation4 [shape = 'u8[8192]{0}', space=vmem, size = 0x2000, scoped, tag = 'input window, operand 0, single buffered']
    #allocation5 [shape = 's32[1]{0}', space=sflag, size = 0x4, scoped, tag = 'scoped memory for tpu_custom_call.1']
    #allocation6 [shape = 'u8[8192]{0}', space=vmem, size = 0x2000, scoped, tag = 'input window, operand 1, single buffered']
    #allocation7 [shape = 's32[1]{0}', space=sflag, size = 0x4, scoped, tag = 'scoped memory for tpu_custom_call.1']
    %7 = vsyncpa [#allocation5], 0
    %8 = vsyncpa [#allocation7], 0
    // Predicated region
    $region2: #{tpu_custom_call.1} parent=1 // pred_check
      _
    $region3: #{tpu_custom_call.1} parent=1 // pred_check_branch
      %10 = sbr.rel (0) target = $region5
    $region4: #{tpu_custom_call.1} parent=1 // pred_region
      %s12 = ssub.s32 256, 256
      %13 = vsyncadd [#allocation5], %s12
      %s15 = sshll.u32 [#allocation4], 4
      %s16 = int_to_ptr.vmem [resolvable:$true] %s15
      %18 = dma.hbm_to_vmem [thread:$0]  %s0, 256, %s16, [#allocation5]
    $region5: #{tpu_custom_call.1} parent=1 // pred_fallthru
      _
    // Predicated region
    $region6: #{tpu_custom_call.1} parent=1 // pred_check
      _
    $region7: #{tpu_custom_call.1} parent=1 // pred_check_branch
      %20 = sbr.rel (0) target = $region9
    $region8: #{tpu_custom_call.1} parent=1 // pred_region
      %s22 = ssub.s32 256, 256
      %23 = vsyncadd [#allocation7], %s22
      %s25 = sshll.u32 [#allocation6], 4
      %s26 = int_to_ptr.vmem [resolvable:$true] %s25
      %28 = dma.hbm_to_vmem [thread:$0]  %s1, 256, %s26, [#allocation7]
    $region9: #{tpu_custom_call.1} parent=1 // pred_fallthru
      _
    // Predicated region
    $region10: #{tpu_custom_call.1} parent=1 // pred_check
      _
    $region11: #{tpu_custom_call.1} parent=1 // pred_check_branch
      %30 = sbr.rel (0) target = $region13
    $region12: #{tpu_custom_call.1} parent=1 // pred_region
      %31 = dma.done [#allocation5], 256
    $region13: #{tpu_custom_call.1} parent=1 // pred_fallthru
      _
    // Predicated region
    $region14: #{tpu_custom_call.1} parent=1 // pred_check
      _
    $region15: #{tpu_custom_call.1} parent=1 // pred_check_branch
      %33 = sbr.rel (0) target = $region17
    $region16: #{tpu_custom_call.1} parent=1 // pred_region
      %34 = dma.done [#allocation7], 256
    $region17: #{tpu_custom_call.1} parent=1 // pred_fallthru
      _
    %p35 = scmp.eq.s32.totalorder 0, 0
    // Predicated region
    $region18: #{tpu_custom_call.1} parent=1 // pred_check
      %p36 = pneg %p35
    $region19: #{tpu_custom_call.1} parent=1 // pred_check_branch
      %38 = sbr.rel (%p36) target = $region21
    $region20: #{tpu_custom_call.1} parent=1 // pred_region
      %39 = vst [vmem:[#allocation2] sm:$0xff] 0.0
      %40 = vst [vmem:[#allocation3] sm:$0xff] 0.0
    $region21: #{tpu_custom_call.1} parent=1 // pred_fallthru
      _
    %v41 = vld [vmem:[#allocation4] sm:$0xff]
    %v42 = vld [vmem:[#allocation4 + $0x8] sm:$0xff]
    %v43 = vld [vmem:[#allocation6] sm:$0xff]
    %v44 = vld [vmem:[#allocation6 + $0x8] sm:$0xff]
    %v45 = vmul.f32 %v41, %v43
    %v46 = vmul.f32 %v42, %v44
    %v47 = vadd.f32 %v41, %v43
    %v48 = vadd.f32 %v42, %v44
    %v49 = vadd.f32 %v45, %v46
    %v50 = vadd.f32 %v47, %v48
    %v51 = vld [vmem:[#allocation2] sm:$0xff]
    %v52 = vadd.f32 %v51, %v49
    %53 = vst [vmem:[#allocation2] sm:$0xff] %v52
    %v54 = vld [vmem:[#allocation3] sm:$0xff]
    %v55 = vadd.f32 %v54, %v50
    %56 = vst [vmem:[#allocation3] sm:$0xff] %v55
    // Predicated region
    $region22: #{tpu_custom_call.1} parent=1 // pred_check
      %p57 = pneg %p35
    $region23: #{tpu_custom_call.1} parent=1 // pred_check_branch
      %59 = sbr.rel (%p57) target = $region25
    $region24: #{tpu_custom_call.1} parent=1 // pred_region
      %v60 = vld [vmem:[#allocation2] sm:$0xff]
      %61 = vadd.xlane.f32.xlu0 %v60
      %v62 = vpop.xlane.xlu0 %61
      %v63 = vld [vmem:[#allocation3] sm:$0xff]
      %64 = vadd.xlane.f32.xlu0 %v63
      %v65 = vpop.xlane.xlu0 %64
      %v66 = vmul.f32 %v62, 2.0
      %v67 = vadd.f32 %v66, 1.0
      %v68 = vadd.f32 %v65, 1.0
      %v69 = vrcp.pop %v68
      %v70 = vmul.f32 %v67, %v69
      %v71 = vsub.f32 1.0, %v70
      %vm72 = vcmask 7168
      %73 = vst.msk [vmem:[%s2] sm:$0xff] %vm72, %v71
    $region25: #{tpu_custom_call.1} parent=1 // pred_fallthru
      _
    // Predicated region
    $region26: #{tpu_custom_call.1} parent=1 // pred_check
      _
    $region27: #{tpu_custom_call.1} parent=1 // pred_check_branch
      %75 = sbr.rel (0) target = $region29
    $region28: #{tpu_custom_call.1} parent=1 // pred_region
      _
    $region29: #{tpu_custom_call.1} parent=1 // pred_fallthru
      _
    // Predicated region
    $region30: #{tpu_custom_call.1} parent=1 // pred_check
      _
    $region31: #{tpu_custom_call.1} parent=1 // pred_check_branch
      %77 = sbr.rel (0) target = $region33
    $region32: #{tpu_custom_call.1} parent=1 // pred_region
      _
    $region33: #{tpu_custom_call.1} parent=1 // pred_fallthru
      _
    %78 = vsyncpa [#allocation5], 1
    %79 = vsyncpa [#allocation7], 1

</llo_original>
